<compile_context>
chip_gen: v7x
topology: tpu7x:2x2x1
jax: 0.10.0
libtpu: 0.0.40
codegen_flags: <defaults>
</compile_context>

<pallas_src>
import math

import jax
import jax.numpy as jnp
from jax.experimental import pallas as pl
from jax.experimental.pallas import tpu as pltpu


def _rnn_fused_kernel(xw_ref, h0_ref, whh_ref, wout_ref, bout_ref,
                      logits_ref, state_ref, y_scratch):
    """Full RNNModel forward: in-kernel recurrence + hoisted output Linear.

    xw_ref:     (T, B, H)  precomputed x_t @ W_ih + (b_ih + b_hh)
    h0_ref:     (B, H)     initial hidden state
    whh_ref:    (H, H)     hidden->hidden weights (transposed: h @ W)
    wout_ref:   (H, V)     output Linear weights (transposed)
    bout_ref:   (1, V)     output Linear bias
    logits_ref: (T*B, V)   Linear output over all steps
    state_ref:  (B, H)     final hidden state
    y_scratch:  (T*B, H)   VMEM buffer holding every step's hidden state
    """
    T, B, _ = xw_ref.shape
    whh = whh_ref[...]  # hoisted: loaded once, reused every step

    def step(t, h):
        # Only the (B,H) x (H,H) recurrence is inherently sequential.
        h_new = jnp.tanh(
            xw_ref[t] + jnp.dot(h, whh, preferred_element_type=jnp.float32)
        )
        row = pl.multiple_of(t * B, B)
        y_scratch[pl.ds(row, B), :] = h_new
        return h_new

    h_last = jax.lax.fori_loop(0, T, step, h0_ref[...], unroll=True)
    state_ref[...] = h_last

    # Hoisted output Linear: one big (T*B, H) x (H, V) matmul, lane-dense store.
    logits_ref[...] = (
        jnp.dot(y_scratch[...], wout_ref[...], preferred_element_type=jnp.float32)
        + bout_ref[...]
    )


@jax.jit
def rnn_model_forward(inputs, state, params):
    """Forward pass matching RNNModel.forward.

    inputs: (B, T) int32 token ids
    state:  (1, B, H) float32 initial hidden state
    params: dict with W_ih (V,H), W_hh (H,H), b (H,), W_out (H,V), b_out (V,)

    Returns (output, new_state) with output: (T*B, V), new_state: (1, B, H).
    """
    W_ih, W_hh = params["W_ih"], params["W_hh"]
    W_out, b_out = params["W_out"], params["b_out"]
    b = params["b"]

    B, T = inputs.shape
    V, H = W_ih.shape

    # one_hot(inputs.T) @ W_ih  ==  row-gather of W_ih; fold the combined bias.
    # This replaces the (T,B,V) one-hot materialization + per-step input matmul.
    xw = jnp.take(W_ih, inputs.T, axis=0) + b        # (T, B, H)
    h0 = state[0]                                    # (B, H)
    bo2 = b_out.reshape(1, V)

    logits, h_last = pl.pallas_call(
        _rnn_fused_kernel,
        out_shape=(
            jax.ShapeDtypeStruct((T * B, V), jnp.float32),
            jax.ShapeDtypeStruct((B, H), jnp.float32),
        ),
        grid=(1,),  # single grid step: the time loop lives inside the kernel
        in_specs=[
            pl.BlockSpec((T, B, H), lambda i: (0, 0, 0)),   # xw (fully VMEM-resident)
            pl.BlockSpec((B, H), lambda i: (0, 0)),         # h0
            pl.BlockSpec((H, H), lambda i: (0, 0)),         # W_hh
            pl.BlockSpec((H, V), lambda i: (0, 0)),         # W_out
            pl.BlockSpec((1, V), lambda i: (0, 0)),         # b_out
        ],
        out_specs=(
            pl.BlockSpec((T * B, V), lambda i: (0, 0)),     # logits
            pl.BlockSpec((B, H), lambda i: (0, 0)),         # final state
        ),
        scratch_shapes=[pltpu.VMEM((T * B, H), jnp.float32)],
        compiler_params=pltpu.CompilerParams(
            dimension_semantics=("arbitrary",),
        ),
    )(xw, h0, W_hh, W_out, bo2)

    return logits, h_last[None]     # state shape (1, B, H)


def init_params(key, vocab_size, num_hiddens):
    """Deterministic init mimicking PyTorch nn.RNN / nn.Linear default init."""
    k = jax.random.split(key, 6)
    s_rnn = 1.0 / math.sqrt(num_hiddens)
    s_lin = 1.0 / math.sqrt(num_hiddens)
    # Stored pre-transposed so the kernel computes x @ W directly.
    W_ih = jax.random.uniform(k[0], (vocab_size, num_hiddens), jnp.float32, -s_rnn, s_rnn)
    W_hh = jax.random.uniform(k[1], (num_hiddens, num_hiddens), jnp.float32, -s_rnn, s_rnn)
    b_ih = jax.random.uniform(k[2], (num_hiddens,), jnp.float32, -s_rnn, s_rnn)
    b_hh = jax.random.uniform(k[3], (num_hiddens,), jnp.float32, -s_rnn, s_rnn)
    W_out = jax.random.uniform(k[4], (num_hiddens, vocab_size), jnp.float32, -s_lin, s_lin)
    b_out = jax.random.uniform(k[5], (vocab_size,), jnp.float32, -s_lin, s_lin)
    return {
        "W_ih": W_ih,
        "W_hh": W_hh,
        "b": b_ih + b_hh,   # biases only ever appear summed
        "W_out": W_out,
        "b_out": b_out,
    }


def _reference_forward(inputs, state, params):
    """Pure-JAX reference of the same forward pass (for validation)."""
    V, H = params["W_ih"].shape
    X = jax.nn.one_hot(inputs.T, V, dtype=jnp.float32)   # (T, B, V)

    def step(h, x_t):
        h_new = jnp.tanh(x_t @ params["W_ih"] + h @ params["W_hh"] + params["b"])
        return h_new, h_new

    h_last, Y = jax.lax.scan(step, state[0], X)
    out = Y.reshape(-1, H) @ params["W_out"] + params["b_out"]
    return out, h_last[None]


if __name__ == "__main__":
    key = jax.random.PRNGKey(0)
    vocab_size = 32
    num_hiddens = 32
    batch = 8
    seq = 8

    k_tok, k_par = jax.random.split(key)
    inputs = jax.random.randint(k_tok, (batch, seq), 0, vocab_size, dtype=jnp.int32)
    params = init_params(k_par, vocab_size, num_hiddens)
    # begin_state: zeros of shape (num_directions * num_layers, batch, hidden) = (1, B, H)
    state0 = jnp.zeros((1, batch, num_hiddens), jnp.float32)

    out, new_state = rnn_model_forward(inputs, state0, params)
    out = jax.block_until_ready(out)
    new_state = jax.block_until_ready(new_state)

    assert out.shape == (seq * batch, vocab_size)
    assert new_state.shape == (1, batch, num_hiddens)

    ref_out, ref_state = _reference_forward(inputs, state0, params)
    assert jnp.allclose(out, ref_out, atol=1e-5, rtol=1e-5)
    assert jnp.allclose(new_state, ref_state, atol=1e-5, rtol=1e-5)

    print("KERNEL_OK")
</pallas_src>

<mosaic_0001>
module attributes {stable_mosaic.version = 11 : i64} {
  func.func @_rnn_fused_kernel(%arg0: i32, %arg1: memref<8x8x32xf32, #tpu.memory_space<vmem>>, %arg2: memref<8x32xf32, #tpu.memory_space<vmem>>, %arg3: memref<32x32xf32, #tpu.memory_space<vmem>>, %arg4: memref<32x32xf32, #tpu.memory_space<vmem>>, %arg5: memref<1x32xf32, #tpu.memory_space<vmem>>, %arg6: memref<64x32xf32, #tpu.memory_space<vmem>>, %arg7: memref<8x32xf32, #tpu.memory_space<vmem>>, %arg8: memref<64x32xf32, #tpu.memory_space<vmem>>) attributes {dimension_semantics = [#tpu.dimension_semantics<arbitrary>], iteration_bounds = array<i64: 1>, scalar_prefetch = 0 : i64, scratch_operands = 1 : i64, tpu.core_type = #tpu.core_type<tc>, window_params = [{pipeline_mode = #tpu.pipeline_mode<synchronous>, transform_indices = @transform_0, window_bounds = array<i64: 8, 8, 32>}, {pipeline_mode = #tpu.pipeline_mode<synchronous>, transform_indices = @transform_1, window_bounds = array<i64: 8, 32>}, {pipeline_mode = #tpu.pipeline_mode<synchronous>, transform_indices = @transform_2, window_bounds = array<i64: 32, 32>}, {pipeline_mode = #tpu.pipeline_mode<synchronous>, transform_indices = @transform_3, window_bounds = array<i64: 32, 32>}, {pipeline_mode = #tpu.pipeline_mode<synchronous>, transform_indices = @transform_4, window_bounds = array<i64: 1, 32>}, {pipeline_mode = #tpu.pipeline_mode<synchronous>, transform_indices = @transform_5, window_bounds = array<i64: 64, 32>}, {pipeline_mode = #tpu.pipeline_mode<synchronous>, transform_indices = @transform_6, window_bounds = array<i64: 8, 32>}]} {
    %c0 = arith.constant 0 : index
    %c0_0 = arith.constant 0 : index
    %0 = vector.load %arg3[%c0, %c0_0] : memref<32x32xf32, #tpu.memory_space<vmem>>, vector<32x32xf32>
    %c0_1 = arith.constant 0 : index
    %c0_2 = arith.constant 0 : index
    %1 = vector.load %arg2[%c0_1, %c0_2] : memref<8x32xf32, #tpu.memory_space<vmem>>, vector<8x32xf32>
    %c0_i32 = arith.constant 0 : i32
    %2 = arith.index_cast %c0_i32 : i32 to index
    %c0_3 = arith.constant 0 : index
    %c0_4 = arith.constant 0 : index
    %3 = vector.load %arg1[%2, %c0_3, %c0_4] : memref<8x8x32xf32, #tpu.memory_space<vmem>>, vector<1x8x32xf32>
    %4 = vector.shape_cast %3 : vector<1x8x32xf32> to vector<8x32xf32>
    %cst = arith.constant dense<0.000000e+00> : vector<8x32xf32>
    %5 = tpu.matmul %1, %0, %cst {dimension_numbers = #tpu.dot_dimension_numbers<[1], [0], [0], [1], [0, 0, 1, 1], [], []>} : vector<8x32xf32>, vector<32x32xf32>, vector<8x32xf32> -> vector<8x32xf32>
    %6 = arith.addf %4, %5 : vector<8x32xf32>
    %7 = math.tanh %6 : vector<8x32xf32>
    %c8_i32 = arith.constant 8 : i32
    %8 = arith.muli %c0_i32, %c8_i32 : i32
    %9 = tpu.assume_multiple %8, 8 : i32
    %10 = arith.index_cast %9 : i32 to index
    %c0_5 = arith.constant 0 : index
    %11 = vector.load %arg8[%10, %c0_5] : memref<64x32xf32, #tpu.memory_space<vmem>>, vector<8x32xf32>
    tpu.vector_store %arg8[%10, %c0_5], %7 {strides = array<i32>} : memref<64x32xf32, #tpu.memory_space<vmem>>, vector<8x32xf32>,
    %c1_i32 = arith.constant 1 : i32
    %12 = arith.index_cast %c1_i32 : i32 to index
    %c0_6 = arith.constant 0 : index
    %c0_7 = arith.constant 0 : index
    %13 = vector.load %arg1[%12, %c0_6, %c0_7] : memref<8x8x32xf32, #tpu.memory_space<vmem>>, vector<1x8x32xf32>
    %14 = vector.shape_cast %13 : vector<1x8x32xf32> to vector<8x32xf32>
    %cst_8 = arith.constant dense<0.000000e+00> : vector<8x32xf32>
    %15 = tpu.matmul %7, %0, %cst_8 {dimension_numbers = #tpu.dot_dimension_numbers<[1], [0], [0], [1], [0, 0, 1, 1], [], []>} : vector<8x32xf32>, vector<32x32xf32>, vector<8x32xf32> -> vector<8x32xf32>
    %16 = arith.addf %14, %15 : vector<8x32xf32>
    %17 = math.tanh %16 : vector<8x32xf32>
    %c8_i32_9 = arith.constant 8 : i32
    %18 = arith.muli %c1_i32, %c8_i32_9 : i32
    %19 = tpu.assume_multiple %18, 8 : i32
    %20 = arith.index_cast %19 : i32 to index
    %c0_10 = arith.constant 0 : index
    %21 = vector.load %arg8[%20, %c0_10] : memref<64x32xf32, #tpu.memory_space<vmem>>, vector<8x32xf32>
    tpu.vector_store %arg8[%20, %c0_10], %17 {strides = array<i32>} : memref<64x32xf32, #tpu.memory_space<vmem>>, vector<8x32xf32>,
    %c2_i32 = arith.constant 2 : i32
    %22 = arith.index_cast %c2_i32 : i32 to index
    %c0_11 = arith.constant 0 : index
    %c0_12 = arith.constant 0 : index
    %23 = vector.load %arg1[%22, %c0_11, %c0_12] : memref<8x8x32xf32, #tpu.memory_space<vmem>>, vector<1x8x32xf32>
    %24 = vector.shape_cast %23 : vector<1x8x32xf32> to vector<8x32xf32>
    %cst_13 = arith.constant dense<0.000000e+00> : vector<8x32xf32>
    %25 = tpu.matmul %17, %0, %cst_13 {dimension_numbers = #tpu.dot_dimension_numbers<[1], [0], [0], [1], [0, 0, 1, 1], [], []>} : vector<8x32xf32>, vector<32x32xf32>, vector<8x32xf32> -> vector<8x32xf32>
    %26 = arith.addf %24, %25 : vector<8x32xf32>
    %27 = math.tanh %26 : vector<8x32xf32>
    %c8_i32_14 = arith.constant 8 : i32
    %28 = arith.muli %c2_i32, %c8_i32_14 : i32
    %29 = tpu.assume_multiple %28, 8 : i32
    %30 = arith.index_cast %29 : i32 to index
    %c0_15 = arith.constant 0 : index
    %31 = vector.load %arg8[%30, %c0_15] : memref<64x32xf32, #tpu.memory_space<vmem>>, vector<8x32xf32>
    tpu.vector_store %arg8[%30, %c0_15], %27 {strides = array<i32>} : memref<64x32xf32, #tpu.memory_space<vmem>>, vector<8x32xf32>,
    %c3_i32 = arith.constant 3 : i32
    %32 = arith.index_cast %c3_i32 : i32 to index
    %c0_16 = arith.constant 0 : index
    %c0_17 = arith.constant 0 : index
    %33 = vector.load %arg1[%32, %c0_16, %c0_17] : memref<8x8x32xf32, #tpu.memory_space<vmem>>, vector<1x8x32xf32>
    %34 = vector.shape_cast %33 : vector<1x8x32xf32> to vector<8x32xf32>
    %cst_18 = arith.constant dense<0.000000e+00> : vector<8x32xf32>
    %35 = tpu.matmul %27, %0, %cst_18 {dimension_numbers = #tpu.dot_dimension_numbers<[1], [0], [0], [1], [0, 0, 1, 1], [], []>} : vector<8x32xf32>, vector<32x32xf32>, vector<8x32xf32> -> vector<8x32xf32>
    %36 = arith.addf %34, %35 : vector<8x32xf32>
    %37 = math.tanh %36 : vector<8x32xf32>
    %c8_i32_19 = arith.constant 8 : i32
    %38 = arith.muli %c3_i32, %c8_i32_19 : i32
    %39 = tpu.assume_multiple %38, 8 : i32
    %40 = arith.index_cast %39 : i32 to index
    %c0_20 = arith.constant 0 : index
    %41 = vector.load %arg8[%40, %c0_20] : memref<64x32xf32, #tpu.memory_space<vmem>>, vector<8x32xf32>
    tpu.vector_store %arg8[%40, %c0_20], %37 {strides = array<i32>} : memref<64x32xf32, #tpu.memory_space<vmem>>, vector<8x32xf32>,
    %c4_i32 = arith.constant 4 : i32
    %42 = arith.index_cast %c4_i32 : i32 to index
    %c0_21 = arith.constant 0 : index
    %c0_22 = arith.constant 0 : index
    %43 = vector.load %arg1[%42, %c0_21, %c0_22] : memref<8x8x32xf32, #tpu.memory_space<vmem>>, vector<1x8x32xf32>
    %44 = vector.shape_cast %43 : vector<1x8x32xf32> to vector<8x32xf32>
    %cst_23 = arith.constant dense<0.000000e+00> : vector<8x32xf32>
    %45 = tpu.matmul %37, %0, %cst_23 {dimension_numbers = #tpu.dot_dimension_numbers<[1], [0], [0], [1], [0, 0, 1, 1], [], []>} : vector<8x32xf32>, vector<32x32xf32>, vector<8x32xf32> -> vector<8x32xf32>
    %46 = arith.addf %44, %45 : vector<8x32xf32>
    %47 = math.tanh %46 : vector<8x32xf32>
    %c8_i32_24 = arith.constant 8 : i32
    %48 = arith.muli %c4_i32, %c8_i32_24 : i32
    %49 = tpu.assume_multiple %48, 8 : i32
    %50 = arith.index_cast %49 : i32 to index
    %c0_25 = arith.constant 0 : index
    %51 = vector.load %arg8[%50, %c0_25] : memref<64x32xf32, #tpu.memory_space<vmem>>, vector<8x32xf32>
    tpu.vector_store %arg8[%50, %c0_25], %47 {strides = array<i32>} : memref<64x32xf32, #tpu.memory_space<vmem>>, vector<8x32xf32>,
    %c5_i32 = arith.constant 5 : i32
    %52 = arith.index_cast %c5_i32 : i32 to index
    %c0_26 = arith.constant 0 : index
    %c0_27 = arith.constant 0 : index
    %53 = vector.load %arg1[%52, %c0_26, %c0_27] : memref<8x8x32xf32, #tpu.memory_space<vmem>>, vector<1x8x32xf32>
    %54 = vector.shape_cast %53 : vector<1x8x32xf32> to vector<8x32xf32>
    %cst_28 = arith.constant dense<0.000000e+00> : vector<8x32xf32>
    %55 = tpu.matmul %47, %0, %cst_28 {dimension_numbers = #tpu.dot_dimension_numbers<[1], [0], [0], [1], [0, 0, 1, 1], [], []>} : vector<8x32xf32>, vector<32x32xf32>, vector<8x32xf32> -> vector<8x32xf32>
    %56 = arith.addf %54, %55 : vector<8x32xf32>
    %57 = math.tanh %56 : vector<8x32xf32>
    %c8_i32_29 = arith.constant 8 : i32
    %58 = arith.muli %c5_i32, %c8_i32_29 : i32
    %59 = tpu.assume_multiple %58, 8 : i32
    %60 = arith.index_cast %59 : i32 to index
    %c0_30 = arith.constant 0 : index
    %61 = vector.load %arg8[%60, %c0_30] : memref<64x32xf32, #tpu.memory_space<vmem>>, vector<8x32xf32>
    tpu.vector_store %arg8[%60, %c0_30], %57 {strides = array<i32>} : memref<64x32xf32, #tpu.memory_space<vmem>>, vector<8x32xf32>,
    %c6_i32 = arith.constant 6 : i32
    %62 = arith.index_cast %c6_i32 : i32 to index
    %c0_31 = arith.constant 0 : index
    %c0_32 = arith.constant 0 : index
    %63 = vector.load %arg1[%62, %c0_31, %c0_32] : memref<8x8x32xf32, #tpu.memory_space<vmem>>, vector<1x8x32xf32>
    %64 = vector.shape_cast %63 : vector<1x8x32xf32> to vector<8x32xf32>
    %cst_33 = arith.constant dense<0.000000e+00> : vector<8x32xf32>
    %65 = tpu.matmul %57, %0, %cst_33 {dimension_numbers = #tpu.dot_dimension_numbers<[1], [0], [0], [1], [0, 0, 1, 1], [], []>} : vector<8x32xf32>, vector<32x32xf32>, vector<8x32xf32> -> vector<8x32xf32>
    %66 = arith.addf %64, %65 : vector<8x32xf32>
    %67 = math.tanh %66 : vector<8x32xf32>
    %c8_i32_34 = arith.constant 8 : i32
    %68 = arith.muli %c6_i32, %c8_i32_34 : i32
    %69 = tpu.assume_multiple %68, 8 : i32
    %70 = arith.index_cast %69 : i32 to index
    %c0_35 = arith.constant 0 : index
    %71 = vector.load %arg8[%70, %c0_35] : memref<64x32xf32, #tpu.memory_space<vmem>>, vector<8x32xf32>
    tpu.vector_store %arg8[%70, %c0_35], %67 {strides = array<i32>} : memref<64x32xf32, #tpu.memory_space<vmem>>, vector<8x32xf32>,
    %c7_i32 = arith.constant 7 : i32
    %72 = arith.index_cast %c7_i32 : i32 to index
    %c0_36 = arith.constant 0 : index
    %c0_37 = arith.constant 0 : index
    %73 = vector.load %arg1[%72, %c0_36, %c0_37] : memref<8x8x32xf32, #tpu.memory_space<vmem>>, vector<1x8x32xf32>
    %74 = vector.shape_cast %73 : vector<1x8x32xf32> to vector<8x32xf32>
    %cst_38 = arith.constant dense<0.000000e+00> : vector<8x32xf32>
    %75 = tpu.matmul %67, %0, %cst_38 {dimension_numbers = #tpu.dot_dimension_numbers<[1], [0], [0], [1], [0, 0, 1, 1], [], []>} : vector<8x32xf32>, vector<32x32xf32>, vector<8x32xf32> -> vector<8x32xf32>
    %76 = arith.addf %74, %75 : vector<8x32xf32>
    %77 = math.tanh %76 : vector<8x32xf32>
    %c8_i32_39 = arith.constant 8 : i32
    %78 = arith.muli %c7_i32, %c8_i32_39 : i32
    %79 = tpu.assume_multiple %78, 8 : i32
    %80 = arith.index_cast %79 : i32 to index
    %c0_40 = arith.constant 0 : index
    %81 = vector.load %arg8[%80, %c0_40] : memref<64x32xf32, #tpu.memory_space<vmem>>, vector<8x32xf32>
    tpu.vector_store %arg8[%80, %c0_40], %77 {strides = array<i32>} : memref<64x32xf32, #tpu.memory_space<vmem>>, vector<8x32xf32>,
    %c8_i32_41 = arith.constant 8 : i32
    %c0_42 = arith.constant 0 : index
    %c0_43 = arith.constant 0 : index
    %82 = vector.load %arg7[%c0_42, %c0_43] : memref<8x32xf32, #tpu.memory_space<vmem>>, vector<8x32xf32>
    tpu.vector_store %arg7[%c0_42, %c0_43], %77 {strides = array<i32>} : memref<8x32xf32, #tpu.memory_space<vmem>>, vector<8x32xf32>,
    %c0_44 = arith.constant 0 : index
    %c0_45 = arith.constant 0 : index
    %83 = vector.load %arg8[%c0_44, %c0_45] : memref<64x32xf32, #tpu.memory_space<vmem>>, vector<64x32xf32>
    %c0_46 = arith.constant 0 : index
    %c0_47 = arith.constant 0 : index
    %84 = vector.load %arg4[%c0_46, %c0_47] : memref<32x32xf32, #tpu.memory_space<vmem>>, vector<32x32xf32>
    %cst_48 = arith.constant dense<0.000000e+00> : vector<64x32xf32>
    %85 = tpu.matmul %83, %84, %cst_48 {dimension_numbers = #tpu.dot_dimension_numbers<[1], [0], [0], [1], [0, 0, 1, 1], [], []>} : vector<64x32xf32>, vector<32x32xf32>, vector<64x32xf32> -> vector<64x32xf32>
    %c0_49 = arith.constant 0 : index
    %c0_50 = arith.constant 0 : index
    %86 = vector.load %arg5[%c0_49, %c0_50] : memref<1x32xf32, #tpu.memory_space<vmem>>, vector<1x32xf32>
    %87 = vector.broadcast %86 : vector<1x32xf32> to vector<64x32xf32>
    %88 = arith.addf %85, %87 : vector<64x32xf32>
    %c0_51 = arith.constant 0 : index
    %c0_52 = arith.constant 0 : index
    %89 = vector.load %arg6[%c0_51, %c0_52] : memref<64x32xf32, #tpu.memory_space<vmem>>, vector<64x32xf32>
    tpu.vector_store %arg6[%c0_51, %c0_52], %88 {strides = array<i32>} : memref<64x32xf32, #tpu.memory_space<vmem>>, vector<64x32xf32>,
    return
  }
  func.func @transform_0(%arg0: i32) -> (i32, i32, i32) {
    %c0_i32 = arith.constant 0 : i32
    %c0_i32_0 = arith.constant 0 : i32
    %c0_i32_1 = arith.constant 0 : i32
    %c0_i32_2 = arith.constant 0 : i32
    return %c0_i32, %c0_i32_0, %c0_i32_1 : i32, i32, i32
  }
  func.func @transform_1(%arg0: i32) -> (i32, i32) {
    %c0_i32 = arith.constant 0 : i32
    %c0_i32_0 = arith.constant 0 : i32
    %c0_i32_1 = arith.constant 0 : i32
    return %c0_i32, %c0_i32_0 : i32, i32
  }
  func.func @transform_2(%arg0: i32) -> (i32, i32) {
    %c0_i32 = arith.constant 0 : i32
    %c0_i32_0 = arith.constant 0 : i32
    %c0_i32_1 = arith.constant 0 : i32
    return %c0_i32, %c0_i32_0 : i32, i32
  }
  func.func @transform_3(%arg0: i32) -> (i32, i32) {
    %c0_i32 = arith.constant 0 : i32
    %c0_i32_0 = arith.constant 0 : i32
    %c0_i32_1 = arith.constant 0 : i32
    return %c0_i32, %c0_i32_0 : i32, i32
  }
  func.func @transform_4(%arg0: i32) -> (i32, i32) {
    %c0_i32 = arith.constant 0 : i32
    %c0_i32_0 = arith.constant 0 : i32
    %c0_i32_1 = arith.constant 0 : i32
    return %c0_i32, %c0_i32_0 : i32, i32
  }
  func.func @transform_5(%arg0: i32) -> (i32, i32) {
    %c0_i32 = arith.constant 0 : i32
    %c0_i32_0 = arith.constant 0 : i32
    %c0_i32_1 = arith.constant 0 : i32
    return %c0_i32, %c0_i32_0 : i32, i32
  }
  func.func @transform_6(%arg0: i32) -> (i32, i32) {
    %c0_i32 = arith.constant 0 : i32
    %c0_i32_0 = arith.constant 0 : i32
    %c0_i32_1 = arith.constant 0 : i32
    return %c0_i32, %c0_i32_0 : i32, i32
  }
}

</mosaic_0001>

<llo_original>
// kernel: rnn_model_forward.1
$region0: #{rnn_model_forward.1}
  #allocation0 [shape = 'u32[]', space=smem, size = 0x4, offset = 0x4, fixed_abs, tag = 'smem constant byte address 0x4 - core index']
  #allocation1 [shape = 'u32[144,128]{1,0:T(1,128)}', space=vmem, size = 0x12000, scoped, tag = 'internal scratch']
  #allocation2 [shape = 'f32[64,32]{1,0:T(8,128)}', space=vmem, size = 0x8000, scoped, tag = 'scratch operand']
  %s0 = inlined_call_operand.vmem [shape: f32[8,8,32], index: 0, kind: input, shape index: {}]
  %s1 = inlined_call_operand.vmem [shape: f32[8,32], index: 1, kind: input, shape index: {}]
  %s2 = inlined_call_operand.vmem [shape: f32[32,32], index: 2, kind: input, shape index: {}]
  %s3 = inlined_call_operand.vmem [shape: f32[32,32], index: 3, kind: input, shape index: {}]
  %s4 = inlined_call_operand.vmem [shape: f32[1,32], index: 4, kind: input, shape index: {}]
  %s5 = inlined_call_operand.vmem [shape: f32[64,32], index: 5, kind: output, shape index: {0}]
  %s6 = inlined_call_operand.hbm [shape: f32[8,32], index: 6, kind: output, shape index: {1}]
  %7 = xla_tuple %s5, %s6
  %s8 = sld [smem:[#allocation0]]
  $region38: #{rnn_model_forward.1} parent=0
    _
  %s10 = ssub.s32 1, %s8
  %s11 = scalar_select 0, %s10, %s8
  $region1: #{rnn_model_forward.1} parent=0
    #allocation3 [shape = 'u8[4096]{0}', space=vmem, size = 0x1000, scoped, tag = 'output window, operand 1, single buffered']
    #allocation4 [shape = 's32[1]{0}', space=sflag, size = 0x4, scoped, tag = 'scoped memory for rnn_model_forward.1']
    %12 = vsyncpa [#allocation4], 0
    // Predicated region
    $region2: #{rnn_model_forward.1} parent=1 // pred_check
      _
    $region3: #{rnn_model_forward.1} parent=1 // pred_check_branch
      %14 = sbr.rel (0) target = $region5
    $region4: #{rnn_model_forward.1} parent=1 // pred_region
      _
    $region5: #{rnn_model_forward.1} parent=1 // pred_fallthru
      _
    // Predicated region
    $region6: #{rnn_model_forward.1} parent=1 // pred_check
      _
    $region7: #{rnn_model_forward.1} parent=1 // pred_check_branch
      %16 = sbr.rel (0) target = $region9
    $region8: #{rnn_model_forward.1} parent=1 // pred_region
      _
    $region9: #{rnn_model_forward.1} parent=1 // pred_fallthru
      _
    // Predicated region
    $region10: #{rnn_model_forward.1} parent=1 // pred_check
      _
    $region11: #{rnn_model_forward.1} parent=1 // pred_check_branch
      %18 = sbr.rel (0) target = $region13
    $region12: #{rnn_model_forward.1} parent=1 // pred_region
      _
    $region13: #{rnn_model_forward.1} parent=1 // pred_fallthru
      _
    // Predicated region
    $region14: #{rnn_model_forward.1} parent=1 // pred_check
      _
    $region15: #{rnn_model_forward.1} parent=1 // pred_check_branch
      %20 = sbr.rel (0) target = $region17
    $region16: #{rnn_model_forward.1} parent=1 // pred_region
      _
    $region17: #{rnn_model_forward.1} parent=1 // pred_fallthru
      _
    // Predicated region
    $region18: #{rnn_model_forward.1} parent=1 // pred_check
      _
    $region19: #{rnn_model_forward.1} parent=1 // pred_check_branch
      %22 = sbr.rel (0) target = $region21
    $region20: #{rnn_model_forward.1} parent=1 // pred_region
      _
    $region21: #{rnn_model_forward.1} parent=1 // pred_fallthru
      _
    %v23 = vld [vmem:[%s2] sm:$0xff]
    %v24 = vld [vmem:[%s2 + $0x8] sm:$0xff]
    %v25 = vld [vmem:[%s2 + $0x10] sm:$0xff]
    %v26 = vld [vmem:[%s2 + $0x18] sm:$0xff]
    %v27 = vld [vmem:[%s1] sm:$0xff]
    %v28 = vld [vmem:[%s0] sm:$0xff]
    %vm29 = vcmask 261120
    %v31 = vsel %vm29, %v27, 0
    %33 = vmatprep.subr.mxu0 0.0
    %34 = vmatpush1.msra.mxu0 %v23
    %35 = vmatprep.subr.mxu0 0.0
    %36 = vmatpush1.msra.mxu0 %v24
    %37 = vmatprep.subr.mxu0 0.0
    %38 = vmatpush1.msra.mxu0 %v25
    %39 = vmatprep.subr.mxu0 0.0
    %40 = vmatpush1.msra.mxu0 %v26
    %41 = vmatprep.subr.mxu0 0.0
    %42 = vmatpush1.msra.mxu0 0.0
    %43 = vmatprep.subr.mxu0 0.0
    %44 = vmatpush1.msra.mxu0 0.0
    %45 = vmatprep.subr.mxu0 0.0
    %46 = vmatpush1.msra.mxu0 0.0
    %47 = vmatprep.subr.mxu0 0.0
    %48 = vmatpush1.msra.mxu0 0.0
    %49 = vmatprep.subr.mxu0 0.0
    %50 = vmatpush1.msra.mxu0 0.0
    %51 = vmatprep.subr.mxu0 0.0
    %52 = vmatpush1.msra.mxu0 0.0
    %53 = vmatprep.subr.mxu0 0.0
    %54 = vmatpush1.msra.mxu0 0.0
    %55 = vmatprep.subr.mxu0 0.0
    %56 = vmatpush1.msra.mxu0 0.0
    %57 = vmatprep.subr.mxu0 0.0
    %58 = vmatpush1.msra.mxu0 0.0
    %59 = vmatprep.subr.mxu0 0.0
    %60 = vmatpush1.msra.mxu0 0.0
    %61 = vmatprep.subr.mxu0 0.0
    %62 = vmatpush1.msra.mxu0 0.0
    %63 = vmatprep.subr.mxu0 0.0
    %64 = vmatpush1.msra.mxu0 0.0
    %65 = vmatprep.subr.mxu0 0.0
    %66 = vmatpush1.msra.mxu0 0.0
    %67 = vmatprep.subr.mxu0 0.0
    %68 = vmatpush1.msra.mxu0 0.0
    %69 = vmatprep.subr.mxu0 0.0
    %70 = vmatpush1.msra.mxu0 0.0
    %71 = vmatprep.subr.mxu0 0.0
    %72 = vmatpush1.msra.mxu0 0.0
    %73 = vmatprep.subr.mxu0 0.0
    %74 = vmatpush1.msra.mxu0 0.0
    %75 = vmatprep.subr.mxu0 0.0
    %76 = vmatpush1.msra.mxu0 0.0
    %77 = vmatprep.subr.mxu0 0.0
    %78 = vmatpush1.msra.mxu0 0.0
    %79 = vmatprep.subr.mxu0 0.0
    %80 = vmatpush1.msra.mxu0 0.0
    %81 = vmatprep.subr.mxu0 0.0
    %82 = vmatpush1.msra.mxu0 0.0
    %83 = vmatprep.subr.mxu0 0.0
    %84 = vmatpush1.msra.mxu0 0.0
    %85 = vmatprep.subr.mxu0 0.0
    %86 = vmatpush1.msra.mxu0 0.0
    %87 = vmatprep.subr.mxu0 0.0
    %88 = vmatpush1.msra.mxu0 0.0
    %89 = vmatprep.subr.mxu0 0.0
    %90 = vmatpush1.msra.mxu0 0.0
    %91 = vmatprep.subr.mxu0 0.0
    %92 = vmatpush1.msra.mxu0 0.0
    %93 = vmatprep.subr.mxu0 0.0
    %94 = vmatpush1.msra.mxu0 0.0
    %95 = vmatprep.subr.mxu0 0.0
    %96 = vmatpush1.msra.mxu0 0.0
    %97 = vmatprep.mubr.f32.mxu0 0.0
    %98 = vmatmul.mubr.f32.gmra.mrb[0].mxu0 %v31
    %v99 = vpop.f32.mrb[0].mxu0
    %v100 = vadd.f32 0.0, %v99
    %v101 = vpop.f32.mrb[0].mxu0
    %102 = vdwg.mxu0
    %v103 = vadd.f32 %v28, %v100
    %v104 = vtanh.pop %v103
    %105 = vst.msk [vmem:[#allocation2] sm:$0xff] %vm29, %v104
    %s106 = scalar_lea.vmem %s0, 8
    %v107 = vld [vmem:[%s106] sm:$0xff]
    %v109 = vsel %vm29, %v104, 0
    %111 = vmatprep.subr.mxu0 0.0
    %112 = vmatpush1.msra.mxu0 %v23
    %113 = vmatprep.subr.mxu0 0.0
    %114 = vmatpush1.msra.mxu0 %v24
    %115 = vmatprep.subr.mxu0 0.0
    %116 = vmatpush1.msra.mxu0 %v25
    %117 = vmatprep.subr.mxu0 0.0
    %118 = vmatpush1.msra.mxu0 %v26
    %119 = vmatprep.subr.mxu0 0.0
    %120 = vmatpush1.msra.mxu0 0.0
    %121 = vmatprep.subr.mxu0 0.0
    %122 = vmatpush1.msra.mxu0 0.0
    %123 = vmatprep.subr.mxu0 0.0
    %124 = vmatpush1.msra.mxu0 0.0
    %125 = vmatprep.subr.mxu0 0.0
    %126 = vmatpush1.msra.mxu0 0.0
    %127 = vmatprep.subr.mxu0 0.0
    %128 = vmatpush1.msra.mxu0 0.0
    %129 = vmatprep.subr.mxu0 0.0
    %130 = vmatpush1.msra.mxu0 0.0
    %131 = vmatprep.subr.mxu0 0.0
    %132 = vmatpush1.msra.mxu0 0.0
    %133 = vmatprep.subr.mxu0 0.0
    %134 = vmatpush1.msra.mxu0 0.0
    %135 = vmatprep.subr.mxu0 0.0
    %136 = vmatpush1.msra.mxu0 0.0
    %137 = vmatprep.subr.mxu0 0.0
    %138 = vmatpush1.msra.mxu0 0.0
    %139 = vmatprep.subr.mxu0 0.0
    %140 = vmatpush1.msra.mxu0 0.0
    %141 = vmatprep.subr.mxu0 0.0
    %142 = vmatpush1.msra.mxu0 0.0
    %143 = vmatprep.subr.mxu0 0.0
    %144 = vmatpush1.msra.mxu0 0.0
    %145 = vmatprep.subr.mxu0 0.0
    %146 = vmatpush1.msra.mxu0 0.0
    %147 = vmatprep.subr.mxu0 0.0
    %148 = vmatpush1.msra.mxu0 0.0
    %149 = vmatprep.subr.mxu0 0.0
    %150 = vmatpush1.msra.mxu0 0.0
    %151 = vmatprep.subr.mxu0 0.0
    %152 = vmatpush1.msra.mxu0 0.0
    %153 = vmatprep.subr.mxu0 0.0
    %154 = vmatpush1.msra.mxu0 0.0
    %155 = vmatprep.subr.mxu0 0.0
    %156 = vmatpush1.msra.mxu0 0.0
    %157 = vmatprep.subr.mxu0 0.0
    %158 = vmatpush1.msra.mxu0 0.0
    %159 = vmatprep.subr.mxu0 0.0
    %160 = vmatpush1.msra.mxu0 0.0
    %161 = vmatprep.subr.mxu0 0.0
    %162 = vmatpush1.msra.mxu0 0.0
    %163 = vmatprep.subr.mxu0 0.0
    %164 = vmatpush1.msra.mxu0 0.0
    %165 = vmatprep.subr.mxu0 0.0
    %166 = vmatpush1.msra.mxu0 0.0
    %167 = vmatprep.subr.mxu0 0.0
    %168 = vmatpush1.msra.mxu0 0.0
    %169 = vmatprep.subr.mxu0 0.0
    %170 = vmatpush1.msra.mxu0 0.0
    %171 = vmatprep.subr.mxu0 0.0
    %172 = vmatpush1.msra.mxu0 0.0
    %173 = vmatprep.subr.mxu0 0.0
    %174 = vmatpush1.msra.mxu0 0.0
    %175 = vmatprep.mubr.f32.mxu0 0.0
    %176 = vmatmul.mubr.f32.gmra.mrb[0].mxu0 %v109
    %v177 = vpop.f32.mrb[0].mxu0
    %v178 = vadd.f32 0.0, %v177
    %v179 = vpop.f32.mrb[0].mxu0
    %180 = vdwg.mxu0
    %v181 = vadd.f32 %v107, %v178
    %v182 = vtanh.pop %v181
    %s183 = scalar_lea.vmem [#allocation2], 8
    %184 = vst.msk [vmem:[%s183] sm:$0xff] %vm29, %v182
    %s185 = scalar_lea.vmem %s0, 16
    %v186 = vld [vmem:[%s185] sm:$0xff]
    %v188 = vsel %vm29, %v182, 0
    %190 = vmatprep.subr.mxu0 0.0
    %191 = vmatpush1.msra.mxu0 %v23
    %192 = vmatprep.subr.mxu0 0.0
    %193 = vmatpush1.msra.mxu0 %v24
    %194 = vmatprep.subr.mxu0 0.0
    %195 = vmatpush1.msra.mxu0 %v25
    %196 = vmatprep.subr.mxu0 0.0
    %197 = vmatpush1.msra.mxu0 %v26
    %198 = vmatprep.subr.mxu0 0.0
    %199 = vmatpush1.msra.mxu0 0.0
    %200 = vmatprep.subr.mxu0 0.0
    %201 = vmatpush1.msra.mxu0 0.0
    %202 = vmatprep.subr.mxu0 0.0
    %203 = vmatpush1.msra.mxu0 0.0
    %204 = vmatprep.subr.mxu0 0.0
    %205 = vmatpush1.msra.mxu0 0.0
    %206 = vmatprep.subr.mxu0 0.0
    %207 = vmatpush1.msra.mxu0 0.0
    %208 = vmatprep.subr.mxu0 0.0
    %209 = vmatpush1.msra.mxu0 0.0
    %210 = vmatprep.subr.mxu0 0.0
    %211 = vmatpush1.msra.mxu0 0.0
    %212 = vmatprep.subr.mxu0 0.0
    %213 = vmatpush1.msra.mxu0 0.0
    %214 = vmatprep.subr.mxu0 0.0
    %215 = vmatpush1.msra.mxu0 0.0
    %216 = vmatprep.subr.mxu0 0.0
    %217 = vmatpush1.msra.mxu0 0.0
    %218 = vmatprep.subr.mxu0 0.0
    %219 = vmatpush1.msra.mxu0 0.0
    %220 = vmatprep.subr.mxu0 0.0
    %221 = vmatpush1.msra.mxu0 0.0
    %222 = vmatprep.subr.mxu0 0.0
    %223 = vmatpush1.msra.mxu0 0.0
    %224 = vmatprep.subr.mxu0 0.0
    %225 = vmatpush1.msra.mxu0 0.0
    %226 = vmatprep.subr.mxu0 0.0
    %227 = vmatpush1.msra.mxu0 0.0
    %228 = vmatprep.subr.mxu0 0.0
    %229 = vmatpush1.msra.mxu0 0.0
    %230 = vmatprep.subr.mxu0 0.0
    %231 = vmatpush1.msra.mxu0 0.0
    %232 = vmatprep.subr.mxu0 0.0
    %233 = vmatpush1.msra.mxu0 0.0
    %234 = vmatprep.subr.mxu0 0.0
    %235 = vmatpush1.msra.mxu0 0.0
    %236 = vmatprep.subr.mxu0 0.0
    %237 = vmatpush1.msra.mxu0 0.0
    %238 = vmatprep.subr.mxu0 0.0
    %239 = vmatpush1.msra.mxu0 0.0
    %240 = vmatprep.subr.mxu0 0.0
    %241 = vmatpush1.msra.mxu0 0.0
    %242 = vmatprep.subr.mxu0 0.0
    %243 = vmatpush1.msra.mxu0 0.0
    %244 = vmatprep.subr.mxu0 0.0
    %245 = vmatpush1.msra.mxu0 0.0
    %246 = vmatprep.subr.mxu0 0.0
    %247 = vmatpush1.msra.mxu0 0.0
    %248 = vmatprep.subr.mxu0 0.0
    %249 = vmatpush1.msra.mxu0 0.0
    %250 = vmatprep.subr.mxu0 0.0
    %251 = vmatpush1.msra.mxu0 0.0
    %252 = vmatprep.subr.mxu0 0.0
    %253 = vmatpush1.msra.mxu0 0.0
    %254 = vmatprep.mubr.f32.mxu0 0.0
    %255 = vmatmul.mubr.f32.gmra.mrb[0].mxu0 %v188
    %v256 = vpop.f32.mrb[0].mxu0
    %v257 = vadd.f32 0.0, %v256
    %v258 = vpop.f32.mrb[0].mxu0
    %259 = vdwg.mxu0
    %v260 = vadd.f32 %v186, %v257
    %v261 = vtanh.pop %v260
    %s262 = scalar_lea.vmem [#allocation2], 16
    %263 = vst.msk [vmem:[%s262] sm:$0xff] %vm29, %v261
    %s264 = scalar_lea.vmem %s0, 24
    %v265 = vld [vmem:[%s264] sm:$0xff]
    %v267 = vsel %vm29, %v261, 0
    %269 = vmatprep.subr.mxu0 0.0
    %270 = vmatpush1.msra.mxu0 %v23
    %271 = vmatprep.subr.mxu0 0.0
    %272 = vmatpush1.msra.mxu0 %v24
    %273 = vmatprep.subr.mxu0 0.0
    %274 = vmatpush1.msra.mxu0 %v25
    %275 = vmatprep.subr.mxu0 0.0
    %276 = vmatpush1.msra.mxu0 %v26
    %277 = vmatprep.subr.mxu0 0.0
    %278 = vmatpush1.msra.mxu0 0.0
    %279 = vmatprep.subr.mxu0 0.0
    %280 = vmatpush1.msra.mxu0 0.0
    %281 = vmatprep.subr.mxu0 0.0
    %282 = vmatpush1.msra.mxu0 0.0
    %283 = vmatprep.subr.mxu0 0.0
    %284 = vmatpush1.msra.mxu0 0.0
    %285 = vmatprep.subr.mxu0 0.0
    %286 = vmatpush1.msra.mxu0 0.0
    %287 = vmatprep.subr.mxu0 0.0
    %288 = vmatpush1.msra.mxu0 0.0
    %289 = vmatprep.subr.mxu0 0.0
    %290 = vmatpush1.msra.mxu0 0.0
    %291 = vmatprep.subr.mxu0 0.0
    %292 = vmatpush1.msra.mxu0 0.0
    %293 = vmatprep.subr.mxu0 0.0
    %294 = vmatpush1.msra.mxu0 0.0
    %295 = vmatprep.subr.mxu0 0.0
    %296 = vmatpush1.msra.mxu0 0.0
    %297 = vmatprep.subr.mxu0 0.0
    %298 = vmatpush1.msra.mxu0 0.0
    %299 = vmatprep.subr.mxu0 0.0
    %300 = vmatpush1.msra.mxu0 0.0
    %301 = vmatprep.subr.mxu0 0.0
    %302 = vmatpush1.msra.mxu0 0.0
    %303 = vmatprep.subr.mxu0 0.0
    %304 = vmatpush1.msra.mxu0 0.0
    %305 = vmatprep.subr.mxu0 0.0
    %306 = vmatpush1.msra.mxu0 0.0
    %307 = vmatprep.subr.mxu0 0.0
    %308 = vmatpush1.msra.mxu0 0.0
    %309 = vmatprep.subr.mxu0 0.0
    %310 = vmatpush1.msra.mxu0 0.0
    %311 = vmatprep.subr.mxu0 0.0
    %312 = vmatpush1.msra.mxu0 0.0
    %313 = vmatprep.subr.mxu0 0.0
    %314 = vmatpush1.msra.mxu0 0.0
    %315 = vmatprep.subr.mxu0 0.0
    %316 = vmatpush1.msra.mxu0 0.0
    %317 = vmatprep.subr.mxu0 0.0
    %318 = vmatpush1.msra.mxu0 0.0
    %319 = vmatprep.subr.mxu0 0.0
    %320 = vmatpush1.msra.mxu0 0.0
    %321 = vmatprep.subr.mxu0 0.0
    %322 = vmatpush1.msra.mxu0 0.0
    %323 = vmatprep.subr.mxu0 0.0
    %324 = vmatpush1.msra.mxu0 0.0
    %325 = vmatprep.subr.mxu0 0.0
    %326 = vmatpush1.msra.mxu0 0.0
    %327 = vmatprep.subr.mxu0 0.0
    %328 = vmatpush1.msra.mxu0 0.0
    %329 = vmatprep.subr.mxu0 0.0
    %330 = vmatpush1.msra.mxu0 0.0
    %331 = vmatprep.subr.mxu0 0.0
    %332 = vmatpush1.msra.mxu0 0.0
    %333 = vmatprep.mubr.f32.mxu0 0.0
    %334 = vmatmul.mubr.f32.gmra.mrb[0].mxu0 %v267
    %v335 = vpop.f32.mrb[0].mxu0
    %v336 = vadd.f32 0.0, %v335
    %v337 = vpop.f32.mrb[0].mxu0
    %338 = vdwg.mxu0
    %v339 = vadd.f32 %v265, %v336
    %v340 = vtanh.pop %v339
    %s341 = scalar_lea.vmem [#allocation2], 24
    %342 = vst.msk [vmem:[%s341] sm:$0xff] %vm29, %v340
    %s343 = scalar_lea.vmem %s0, 32
    %v344 = vld [vmem:[%s343] sm:$0xff]
    %v346 = vsel %vm29, %v340, 0
    %348 = vmatprep.subr.mxu0 0.0
    %349 = vmatpush1.msra.mxu0 %v23
    %350 = vmatprep.subr.mxu0 0.0
    %351 = vmatpush1.msra.mxu0 %v24
    %352 = vmatprep.subr.mxu0 0.0
    %353 = vmatpush1.msra.mxu0 %v25
    %354 = vmatprep.subr.mxu0 0.0
    %355 = vmatpush1.msra.mxu0 %v26
    %356 = vmatprep.subr.mxu0 0.0
    %357 = vmatpush1.msra.mxu0 0.0
    %358 = vmatprep.subr.mxu0 0.0
    %359 = vmatpush1.msra.mxu0 0.0
    %360 = vmatprep.subr.mxu0 0.0
    %361 = vmatpush1.msra.mxu0 0.0
    %362 = vmatprep.subr.mxu0 0.0
    %363 = vmatpush1.msra.mxu0 0.0
    %364 = vmatprep.subr.mxu0 0.0
    %365 = vmatpush1.msra.mxu0 0.0
    %366 = vmatprep.subr.mxu0 0.0
    %367 = vmatpush1.msra.mxu0 0.0
    %368 = vmatprep.subr.mxu0 0.0
    %369 = vmatpush1.msra.mxu0 0.0
    %370 = vmatprep.subr.mxu0 0.0
    %371 = vmatpush1.msra.mxu0 0.0
    %372 = vmatprep.subr.mxu0 0.0
    %373 = vmatpush1.msra.mxu0 0.0
    %374 = vmatprep.subr.mxu0 0.0
    %375 = vmatpush1.msra.mxu0 0.0
    %376 = vmatprep.subr.mxu0 0.0
    %377 = vmatpush1.msra.mxu0 0.0
    %378 = vmatprep.subr.mxu0 0.0
    %379 = vmatpush1.msra.mxu0 0.0
    %380 = vmatprep.subr.mxu0 0.0
    %381 = vmatpush1.msra.mxu0 0.0
    %382 = vmatprep.subr.mxu0 0.0
    %383 = vmatpush1.msra.mxu0 0.0
    %384 = vmatprep.subr.mxu0 0.0
    %385 = vmatpush1.msra.mxu0 0.0
    %386 = vmatprep.subr.mxu0 0.0
    %387 = vmatpush1.msra.mxu0 0.0
    %388 = vmatprep.subr.mxu0 0.0
    %389 = vmatpush1.msra.mxu0 0.0
    %390 = vmatprep.subr.mxu0 0.0
    %391 = vmatpush1.msra.mxu0 0.0
    %392 = vmatprep.subr.mxu0 0.0
    %393 = vmatpush1.msra.mxu0 0.0
    %394 = vmatprep.subr.mxu0 0.0
    %395 = vmatpush1.msra.mxu0 0.0
    %396 = vmatprep.subr.mxu0 0.0
    %397 = vmatpush1.msra.mxu0 0.0
    %398 = vmatprep.subr.mxu0 0.0
    %399 = vmatpush1.msra.mxu0 0.0
    %400 = vmatprep.subr.mxu0 0.0
    %401 = vmatpush1.msra.mxu0 0.0
    %402 = vmatprep.subr.mxu0 0.0
    %403 = vmatpush1.msra.mxu0 0.0
    %404 = vmatprep.subr.mxu0 0.0
    %405 = vmatpush1.msra.mxu0 0.0
    %406 = vmatprep.subr.mxu0 0.0
    %407 = vmatpush1.msra.mxu0 0.0
    %408 = vmatprep.subr.mxu0 0.0
    %409 = vmatpush1.msra.mxu0 0.0
    %410 = vmatprep.subr.mxu0 0.0
    %411 = vmatpush1.msra.mxu0 0.0
    %412 = vmatprep.mubr.f32.mxu0 0.0
    %413 = vmatmul.mubr.f32.gmra.mrb[0].mxu0 %v346
    %v414 = vpop.f32.mrb[0].mxu0
    %v415 = vadd.f32 0.0, %v414
    %v416 = vpop.f32.mrb[0].mxu0
    %417 = vdwg.mxu0
    %v418 = vadd.f32 %v344, %v415
    %v419 = vtanh.pop %v418
    %s420 = scalar_lea.vmem [#allocation2], 32
    %421 = vst.msk [vmem:[%s420] sm:$0xff] %vm29, %v419
    %s422 = scalar_lea.vmem %s0, 40
    %v423 = vld [vmem:[%s422] sm:$0xff]
    %v425 = vsel %vm29, %v419, 0
    %427 = vmatprep.subr.mxu0 0.0
    %428 = vmatpush1.msra.mxu0 %v23
    %429 = vmatprep.subr.mxu0 0.0
    %430 = vmatpush1.msra.mxu0 %v24
    %431 = vmatprep.subr.mxu0 0.0
    %432 = vmatpush1.msra.mxu0 %v25
    %433 = vmatprep.subr.mxu0 0.0
    %434 = vmatpush1.msra.mxu0 %v26
    %435 = vmatprep.subr.mxu0 0.0
    %436 = vmatpush1.msra.mxu0 0.0
    %437 = vmatprep.subr.mxu0 0.0
    %438 = vmatpush1.msra.mxu0 0.0
    %439 = vmatprep.subr.mxu0 0.0
    %440 = vmatpush1.msra.mxu0 0.0
    %441 = vmatprep.subr.mxu0 0.0
    %442 = vmatpush1.msra.mxu0 0.0
    %443 = vmatprep.subr.mxu0 0.0
    %444 = vmatpush1.msra.mxu0 0.0
    %445 = vmatprep.subr.mxu0 0.0
    %446 = vmatpush1.msra.mxu0 0.0
    %447 = vmatprep.subr.mxu0 0.0
    %448 = vmatpush1.msra.mxu0 0.0
    %449 = vmatprep.subr.mxu0 0.0
    %450 = vmatpush1.msra.mxu0 0.0
    %451 = vmatprep.subr.mxu0 0.0
    %452 = vmatpush1.msra.mxu0 0.0
    %453 = vmatprep.subr.mxu0 0.0
    %454 = vmatpush1.msra.mxu0 0.0
    %455 = vmatprep.subr.mxu0 0.0
    %456 = vmatpush1.msra.mxu0 0.0
    %457 = vmatprep.subr.mxu0 0.0
    %458 = vmatpush1.msra.mxu0 0.0
    %459 = vmatprep.subr.mxu0 0.0
    %460 = vmatpush1.msra.mxu0 0.0
    %461 = vmatprep.subr.mxu0 0.0
    %462 = vmatpush1.msra.mxu0 0.0
    %463 = vmatprep.subr.mxu0 0.0
    %464 = vmatpush1.msra.mxu0 0.0
    %465 = vmatprep.subr.mxu0 0.0
    %466 = vmatpush1.msra.mxu0 0.0
    %467 = vmatprep.subr.mxu0 0.0
    %468 = vmatpush1.msra.mxu0 0.0
    %469 = vmatprep.subr.mxu0 0.0
    %470 = vmatpush1.msra.mxu0 0.0
    %471 = vmatprep.subr.mxu0 0.0
    %472 = vmatpush1.msra.mxu0 0.0
    %473 = vmatprep.subr.mxu0 0.0
    %474 = vmatpush1.msra.mxu0 0.0
    %475 = vmatprep.subr.mxu0 0.0
    %476 = vmatpush1.msra.mxu0 0.0
    %477 = vmatprep.subr.mxu0 0.0
    %478 = vmatpush1.msra.mxu0 0.0
    %479 = vmatprep.subr.mxu0 0.0
    %480 = vmatpush1.msra.mxu0 0.0
    %481 = vmatprep.subr.mxu0 0.0
    %482 = vmatpush1.msra.mxu0 0.0
    %483 = vmatprep.subr.mxu0 0.0
    %484 = vmatpush1.msra.mxu0 0.0
    %485 = vmatprep.subr.mxu0 0.0
    %486 = vmatpush1.msra.mxu0 0.0
    %487 = vmatprep.subr.mxu0 0.0
    %488 = vmatpush1.msra.mxu0 0.0
    %489 = vmatprep.subr.mxu0 0.0
    %490 = vmatpush1.msra.mxu0 0.0
    %491 = vmatprep.mubr.f32.mxu0 0.0
    %492 = vmatmul.mubr.f32.gmra.mrb[0].mxu0 %v425
    %v493 = vpop.f32.mrb[0].mxu0
    %v494 = vadd.f32 0.0, %v493
    %v495 = vpop.f32.mrb[0].mxu0
    %496 = vdwg.mxu0
    %v497 = vadd.f32 %v423, %v494
    %v498 = vtanh.pop %v497
    %s499 = scalar_lea.vmem [#allocation2], 40
    %500 = vst.msk [vmem:[%s499] sm:$0xff] %vm29, %v498
    %s501 = scalar_lea.vmem %s0, 48
    %v502 = vld [vmem:[%s501] sm:$0xff]
    %v504 = vsel %vm29, %v498, 0
    %506 = vmatprep.subr.mxu0 0.0
    %507 = vmatpush1.msra.mxu0 %v23
    %508 = vmatprep.subr.mxu0 0.0
    %509 = vmatpush1.msra.mxu0 %v24
    %510 = vmatprep.subr.mxu0 0.0
    %511 = vmatpush1.msra.mxu0 %v25
    %512 = vmatprep.subr.mxu0 0.0
    %513 = vmatpush1.msra.mxu0 %v26
    %514 = vmatprep.subr.mxu0 0.0
    %515 = vmatpush1.msra.mxu0 0.0
    %516 = vmatprep.subr.mxu0 0.0
    %517 = vmatpush1.msra.mxu0 0.0
    %518 = vmatprep.subr.mxu0 0.0
    %519 = vmatpush1.msra.mxu0 0.0
    %520 = vmatprep.subr.mxu0 0.0
    %521 = vmatpush1.msra.mxu0 0.0
    %522 = vmatprep.subr.mxu0 0.0
    %523 = vmatpush1.msra.mxu0 0.0
    %524 = vmatprep.subr.mxu0 0.0
    %525 = vmatpush1.msra.mxu0 0.0
    %526 = vmatprep.subr.mxu0 0.0
    %527 = vmatpush1.msra.mxu0 0.0
    %528 = vmatprep.subr.mxu0 0.0
    %529 = vmatpush1.msra.mxu0 0.0
    %530 = vmatprep.subr.mxu0 0.0
    %531 = vmatpush1.msra.mxu0 0.0
    %532 = vmatprep.subr.mxu0 0.0
    %533 = vmatpush1.msra.mxu0 0.0
    %534 = vmatprep.subr.mxu0 0.0
    %535 = vmatpush1.msra.mxu0 0.0
    %536 = vmatprep.subr.mxu0 0.0
    %537 = vmatpush1.msra.mxu0 0.0
    %538 = vmatprep.subr.mxu0 0.0
    %539 = vmatpush1.msra.mxu0 0.0
    %540 = vmatprep.subr.mxu0 0.0
    %541 = vmatpush1.msra.mxu0 0.0
    %542 = vmatprep.subr.mxu0 0.0
    %543 = vmatpush1.msra.mxu0 0.0
    %544 = vmatprep.subr.mxu0 0.0
    %545 = vmatpush1.msra.mxu0 0.0
    %546 = vmatprep.subr.mxu0 0.0
    %547 = vmatpush1.msra.mxu0 0.0
    %548 = vmatprep.subr.mxu0 0.0
    %549 = vmatpush1.msra.mxu0 0.0
    %550 = vmatprep.subr.mxu0 0.0
    %551 = vmatpush1.msra.mxu0 0.0
    %552 = vmatprep.subr.mxu0 0.0
    %553 = vmatpush1.msra.mxu0 0.0
    %554 = vmatprep.subr.mxu0 0.0
    %555 = vmatpush1.msra.mxu0 0.0
    %556 = vmatprep.subr.mxu0 0.0
    %557 = vmatpush1.msra.mxu0 0.0
    %558 = vmatprep.subr.mxu0 0.0
    %559 = vmatpush1.msra.mxu0 0.0
    %560 = vmatprep.subr.mxu0 0.0
    %561 = vmatpush1.msra.mxu0 0.0
    %562 = vmatprep.subr.mxu0 0.0
    %563 = vmatpush1.msra.mxu0 0.0
    %564 = vmatprep.subr.mxu0 0.0
    %565 = vmatpush1.msra.mxu0 0.0
    %566 = vmatprep.subr.mxu0 0.0
    %567 = vmatpush1.msra.mxu0 0.0
    %568 = vmatprep.subr.mxu0 0.0
    %569 = vmatpush1.msra.mxu0 0.0
    %570 = vmatprep.mubr.f32.mxu0 0.0
    %571 = vmatmul.mubr.f32.gmra.mrb[0].mxu0 %v504
    %v572 = vpop.f32.mrb[0].mxu0
    %v573 = vadd.f32 0.0, %v572
    %v574 = vpop.f32.mrb[0].mxu0
    %575 = vdwg.mxu0
    %v576 = vadd.f32 %v502, %v573
    %v577 = vtanh.pop %v576
    %s578 = scalar_lea.vmem [#allocation2], 48
    %579 = vst.msk [vmem:[%s578] sm:$0xff] %vm29, %v577
    %s580 = scalar_lea.vmem %s0, 56
    %v581 = vld [vmem:[%s580] sm:$0xff]
    %v583 = vsel %vm29, %v577, 0
    %585 = vmatprep.subr.mxu0 0.0
    %586 = vmatpush1.msra.mxu0 %v23
    %587 = vmatprep.subr.mxu0 0.0
    %588 = vmatpush1.msra.mxu0 %v24
    %589 = vmatprep.subr.mxu0 0.0
    %590 = vmatpush1.msra.mxu0 %v25
    %591 = vmatprep.subr.mxu0 0.0
    %592 = vmatpush1.msra.mxu0 %v26
    %593 = vmatprep.subr.mxu0 0.0
    %594 = vmatpush1.msra.mxu0 0.0
    %595 = vmatprep.subr.mxu0 0.0
    %596 = vmatpush1.msra.mxu0 0.0
    %597 = vmatprep.subr.mxu0 0.0
    %598 = vmatpush1.msra.mxu0 0.0
    %599 = vmatprep.subr.mxu0 0.0
    %600 = vmatpush1.msra.mxu0 0.0
    %601 = vmatprep.subr.mxu0 0.0
    %602 = vmatpush1.msra.mxu0 0.0
    %603 = vmatprep.subr.mxu0 0.0
    %604 = vmatpush1.msra.mxu0 0.0
    %605 = vmatprep.subr.mxu0 0.0
    %606 = vmatpush1.msra.mxu0 0.0
    %607 = vmatprep.subr.mxu0 0.0
    %608 = vmatpush1.msra.mxu0 0.0
    %609 = vmatprep.subr.mxu0 0.0
    %610 = vmatpush1.msra.mxu0 0.0
    %611 = vmatprep.subr.mxu0 0.0
    %612 = vmatpush1.msra.mxu0 0.0
    %613 = vmatprep.subr.mxu0 0.0
    %614 = vmatpush1.msra.mxu0 0.0
    %615 = vmatprep.subr.mxu0 0.0
    %616 = vmatpush1.msra.mxu0 0.0
    %617 = vmatprep.subr.mxu0 0.0
    %618 = vmatpush1.msra.mxu0 0.0
    %619 = vmatprep.subr.mxu0 0.0
    %620 = vmatpush1.msra.mxu0 0.0
    %621 = vmatprep.subr.mxu0 0.0
    %622 = vmatpush1.msra.mxu0 0.0
    %623 = vmatprep.subr.mxu0 0.0
    %624 = vmatpush1.msra.mxu0 0.0
    %625 = vmatprep.subr.mxu0 0.0
    %626 = vmatpush1.msra.mxu0 0.0
    %627 = vmatprep.subr.mxu0 0.0
    %628 = vmatpush1.msra.mxu0 0.0
    %629 = vmatprep.subr.mxu0 0.0
    %630 = vmatpush1.msra.mxu0 0.0
    %631 = vmatprep.subr.mxu0 0.0
    %632 = vmatpush1.msra.mxu0 0.0
    %633 = vmatprep.subr.mxu0 0.0
    %634 = vmatpush1.msra.mxu0 0.0
    %635 = vmatprep.subr.mxu0 0.0
    %636 = vmatpush1.msra.mxu0 0.0
    %637 = vmatprep.subr.mxu0 0.0
    %638 = vmatpush1.msra.mxu0 0.0
    %639 = vmatprep.subr.mxu0 0.0
    %640 = vmatpush1.msra.mxu0 0.0
    %641 = vmatprep.subr.mxu0 0.0
    %642 = vmatpush1.msra.mxu0 0.0
    %643 = vmatprep.subr.mxu0 0.0
    %644 = vmatpush1.msra.mxu0 0.0
    %645 = vmatprep.subr.mxu0 0.0
    %646 = vmatpush1.msra.mxu0 0.0
    %647 = vmatprep.subr.mxu0 0.0
    %648 = vmatpush1.msra.mxu0 0.0
    %649 = vmatprep.mubr.f32.mxu0 0.0
    %650 = vmatmul.mubr.f32.gmra.mrb[0].mxu0 %v583
    %v651 = vpop.f32.mrb[0].mxu0
    %v652 = vadd.f32 0.0, %v651
    %v653 = vpop.f32.mrb[0].mxu0
    %654 = vdwg.mxu0
    %v655 = vadd.f32 %v581, %v652
    %v656 = vtanh.pop %v655
    %s657 = scalar_lea.vmem [#allocation2], 56
    %658 = vst.msk [vmem:[%s657] sm:$0xff] %vm29, %v656
    %659 = vst.msk [vmem:[#allocation3] sm:$0xff] %vm29, %v656
    %v660 = vld [vmem:[#allocation2] sm:$0xff]
    %v661 = vld [vmem:[#allocation2 + $0x8] sm:$0xff]
    %v662 = vld [vmem:[#allocation2 + $0x10] sm:$0xff]
    %v663 = vld [vmem:[#allocation2 + $0x18] sm:$0xff]
    %v664 = vld [vmem:[#allocation2 + $0x20] sm:$0xff]
    %v665 = vld [vmem:[#allocation2 + $0x28] sm:$0xff]
    %v666 = vld [vmem:[#allocation2 + $0x30] sm:$0xff]
    %v667 = vld [vmem:[#allocation2 + $0x38] sm:$0xff]
    %v668 = vld [vmem:[%s3] sm:$0xff]
    %v669 = vld [vmem:[%s3 + $0x8] sm:$0xff]
    %v670 = vld [vmem:[%s3 + $0x10] sm:$0xff]
    %v671 = vld [vmem:[%s3 + $0x18] sm:$0xff]
    %v672 = vld [vmem:[%s4] sm:$0x1]
    %v674 = vlaneseq
    %v675 = vshrl.u32 %v674, 7
    %v676 = vsub.s32 0, %v675
    %v677 = vrot.slane %v672, %v676
    %v680 = vsel %vm29, %v660, 0
    %v683 = vsel %vm29, %v661, 0
    %v686 = vsel %vm29, %v662, 0
    %v689 = vsel %vm29, %v663, 0
    %v692 = vsel %vm29, %v664, 0
    %v695 = vsel %vm29, %v665, 0
    %v698 = vsel %vm29, %v666, 0
    %v701 = vsel %vm29, %v667, 0
    %703 = vmatprep.subr.mxu0 0.0
    %704 = vmatpush1.msra.mxu0 %v668
    %705 = vmatprep.subr.mxu0 0.0
    %706 = vmatpush1.msra.mxu0 %v669
    %707 = vmatprep.subr.mxu0 0.0
    %708 = vmatpush1.msra.mxu0 %v670
    %709 = vmatprep.subr.mxu0 0.0
    %710 = vmatpush1.msra.mxu0 %v671
    %711 = vmatprep.subr.mxu0 0.0
    %712 = vmatpush1.msra.mxu0 0.0
    %713 = vmatprep.subr.mxu0 0.0
    %714 = vmatpush1.msra.mxu0 0.0
    %715 = vmatprep.subr.mxu0 0.0
    %716 = vmatpush1.msra.mxu0 0.0
    %717 = vmatprep.subr.mxu0 0.0
    %718 = vmatpush1.msra.mxu0 0.0
    %719 = vmatprep.subr.mxu0 0.0
    %720 = vmatpush1.msra.mxu0 0.0
    %721 = vmatprep.subr.mxu0 0.0
    %722 = vmatpush1.msra.mxu0 0.0
    %723 = vmatprep.subr.mxu0 0.0
    %724 = vmatpush1.msra.mxu0 0.0
    %725 = vmatprep.subr.mxu0 0.0
    %726 = vmatpush1.msra.mxu0 0.0
    %727 = vmatprep.subr.mxu0 0.0
    %728 = vmatpush1.msra.mxu0 0.0
    %729 = vmatprep.subr.mxu0 0.0
    %730 = vmatpush1.msra.mxu0 0.0
    %731 = vmatprep.subr.mxu0 0.0
    %732 = vmatpush1.msra.mxu0 0.0
    %733 = vmatprep.subr.mxu0 0.0
    %734 = vmatpush1.msra.mxu0 0.0
    %735 = vmatprep.subr.mxu0 0.0
    %736 = vmatpush1.msra.mxu0 0.0
    %737 = vmatprep.subr.mxu0 0.0
    %738 = vmatpush1.msra.mxu0 0.0
    %739 = vmatprep.subr.mxu0 0.0
    %740 = vmatpush1.msra.mxu0 0.0
    %741 = vmatprep.subr.mxu0 0.0
    %742 = vmatpush1.msra.mxu0 0.0
    %743 = vmatprep.subr.mxu0 0.0
    %744 = vmatpush1.msra.mxu0 0.0
    %745 = vmatprep.subr.mxu0 0.0
    %746 = vmatpush1.msra.mxu0 0.0
    %747 = vmatprep.subr.mxu0 0.0
    %748 = vmatpush1.msra.mxu0 0.0
    %749 = vmatprep.subr.mxu0 0.0
    %750 = vmatpush1.msra.mxu0 0.0
    %751 = vmatprep.subr.mxu0 0.0
    %752 = vmatpush1.msra.mxu0 0.0
    %753 = vmatprep.subr.mxu0 0.0
    %754 = vmatpush1.msra.mxu0 0.0
    %755 = vmatprep.subr.mxu0 0.0
    %756 = vmatpush1.msra.mxu0 0.0
    %757 = vmatprep.subr.mxu0 0.0
    %758 = vmatpush1.msra.mxu0 0.0
    %759 = vmatprep.subr.mxu0 0.0
    %760 = vmatpush1.msra.mxu0 0.0
    %761 = vmatprep.subr.mxu0 0.0
    %762 = vmatpush1.msra.mxu0 0.0
    %763 = vmatprep.subr.mxu0 0.0
    %764 = vmatpush1.msra.mxu0 0.0
    %765 = vmatprep.subr.mxu0 0.0
    %766 = vmatpush1.msra.mxu0 0.0
    %767 = vmatprep.mubr.f32.mxu0 0.0
    %768 = vmatmul.mubr.f32.gmra.mrb[0].mxu0 %v680
    %v769 = vpop.f32.mrb[0].mxu0
    %v770 = vadd.f32 %v677, %v769
    %v771 = vpop.f32.mrb[0].mxu0
    %772 = vmatprep.mubr.f32.mxu0 0.0
    %773 = vmatmul.mubr.f32.gmra.mrb[0].mxu0 %v683
    %v774 = vpop.f32.mrb[0].mxu0
    %v775 = vadd.f32 %v677, %v774
    %v776 = vpop.f32.mrb[0].mxu0
    %777 = vmatprep.mubr.f32.mxu0 0.0
    %778 = vmatmul.mubr.f32.gmra.mrb[0].mxu0 %v686
    %v779 = vpop.f32.mrb[0].mxu0
    %v780 = vadd.f32 %v677, %v779
    %v781 = vpop.f32.mrb[0].mxu0
    %782 = vmatprep.mubr.f32.mxu0 0.0
    %783 = vmatmul.mubr.f32.gmra.mrb[0].mxu0 %v689
    %v784 = vpop.f32.mrb[0].mxu0
    %v785 = vadd.f32 %v677, %v784
    %v786 = vpop.f32.mrb[0].mxu0
    %787 = vmatprep.mubr.f32.mxu0 0.0
    %788 = vmatmul.mubr.f32.gmra.mrb[0].mxu0 %v692
    %v789 = vpop.f32.mrb[0].mxu0
    %v790 = vadd.f32 %v677, %v789
    %v791 = vpop.f32.mrb[0].mxu0
    %792 = vmatprep.mubr.f32.mxu0 0.0
    %793 = vmatmul.mubr.f32.gmra.mrb[0].mxu0 %v695
    %v794 = vpop.f32.mrb[0].mxu0
    %v795 = vadd.f32 %v677, %v794
    %v796 = vpop.f32.mrb[0].mxu0
    %797 = vmatprep.mubr.f32.mxu0 0.0
    %798 = vmatmul.mubr.f32.gmra.mrb[0].mxu0 %v698
    %v799 = vpop.f32.mrb[0].mxu0
    %v800 = vadd.f32 %v677, %v799
    %v801 = vpop.f32.mrb[0].mxu0
    %802 = vmatprep.mubr.f32.mxu0 0.0
    %803 = vmatmul.mubr.f32.gmra.mrb[0].mxu0 %v701
    %v804 = vpop.f32.mrb[0].mxu0
    %v805 = vadd.f32 %v677, %v804
    %v806 = vpop.f32.mrb[0].mxu0
    %807 = vdwg.mxu0
    %808 = vst.msk [vmem:[%s5] sm:$0xff] %vm29, %v770
    %809 = vst.msk [vmem:[%s5 + $0x8] sm:$0xff] %vm29, %v775
    %810 = vst.msk [vmem:[%s5 + $0x10] sm:$0xff] %vm29, %v780
    %811 = vst.msk [vmem:[%s5 + $0x18] sm:$0xff] %vm29, %v785
    %812 = vst.msk [vmem:[%s5 + $0x20] sm:$0xff] %vm29, %v790
    %813 = vst.msk [vmem:[%s5 + $0x28] sm:$0xff] %vm29, %v795
    %814 = vst.msk [vmem:[%s5 + $0x30] sm:$0xff] %vm29, %v800
    %815 = vst.msk [vmem:[%s5 + $0x38] sm:$0xff] %vm29, %v805
    // Predicated region
    $region22: #{rnn_model_forward.1} parent=1 // pred_check
      _
    $region23: #{rnn_model_forward.1} parent=1 // pred_check_branch
      %817 = sbr.rel (0) target = $region25
    $region24: #{rnn_model_forward.1} parent=1 // pred_region
      _
    $region25: #{rnn_model_forward.1} parent=1 // pred_fallthru
      _
    // Predicated region
    $region26: #{rnn_model_forward.1} parent=1 // pred_check
      _
    $region27: #{rnn_model_forward.1} parent=1 // pred_check_branch
      %819 = sbr.rel (0) target = $region29
    $region28: #{rnn_model_forward.1} parent=1 // pred_region
      %s821 = ssub.s32 128, 128
      %822 = vsyncadd [#allocation4], %s821
      %s824 = sshll.u32 [#allocation3], 4
      %s825 = int_to_ptr.vmem [resolvable:$true] %s824
      %827 = dma.vmem_to_hbm [thread:$0]  %s825, 128, %s6, [#allocation4]
    $region29: #{rnn_model_forward.1} parent=1 // pred_fallthru
      _
    // Predicated region
    $region30: #{rnn_model_forward.1} parent=1 // pred_check
      _
    $region31: #{rnn_model_forward.1} parent=1 // pred_check_branch
      %829 = sbr.rel (0) target = $region33
    $region32: #{rnn_model_forward.1} parent=1 // pred_region
      _
    $region33: #{rnn_model_forward.1} parent=1 // pred_fallthru
      _
    // Predicated region
    $region34: #{rnn_model_forward.1} parent=1 // pred_check
      _
    $region35: #{rnn_model_forward.1} parent=1 // pred_check_branch
      %831 = sbr.rel (0) target = $region37
    $region36: #{rnn_model_forward.1} parent=1 // pred_region
      %832 = dma.done [#allocation4], 128
    $region37: #{rnn_model_forward.1} parent=1 // pred_fallthru
      _
    %833 = vsyncpa [#allocation4], 1

</llo_original>
